<compile_context>
chip_gen: v5e
topology: v5e:2x2
jax: 0.10.0
libtpu: 0.0.40
codegen_flags: <defaults>
</compile_context>

<pallas_src>
import functools

import jax
import jax.numpy as jnp
from jax.experimental import pallas as pl
from jax.experimental.pallas import tpu as pltpu

LANES = 128
SUBLANES = 8
CHUNK = SUBLANES * LANES          # 1024: keeps kernel row count a multiple of 8
MAX_TILE_ROWS = 2048              # (2048, 128) f32 block = 1 MiB per input/buffer
MIN_BLOCKS_FOR_SPLIT = 8          # never core-split tiny problems
VMEM_LIMIT_BYTES = 32 * 1024 * 1024
EPS = 1e-9                        # matches the torch forward's `inf=1e-09`


def _num_tensorcores_per_device():
    """Best-effort TensorCore count for one device (conservative default: 1)."""
    try:
        info = pltpu.get_tpu_info()
        for name in ("num_cores", "num_tensorcores", "tensorcore_count",
                     "cores_per_chip", "num_cores_per_chip"):
            v = getattr(info, name, None)
            if isinstance(v, int) and 1 <= v <= 8:
                return min(int(v), 2)
    except Exception:
        pass
    try:
        kind = jax.devices()[0].device_kind.lower()
        if "tpu" in kind and ("7x" in kind or "v7" in kind):
            return 2              # v7x exposes two TensorCores per chip
    except Exception:
        pass
    return 1


def _loss_sums_kernel(cls_ref, reg_ref, tgt_ref, acc_ref, *,
                      gamma, alpha, eps, total_rows, tile_rows, inner,
                      num_clean, split):
    """Accumulates 4 per-(sublane, lane) partial sums into the VMEM out block.

    acc block layout (1, 4, 8, 128):
      [0] sum(focal_bce)            [1] sum((reg - t)^2)   (all elements)
      [2] sum((reg - t)^2 | t > 0)  [3] count(t > 0)
    """
    if split:
        c = pl.program_id(0)
        i = pl.program_id(1)
        blk = c * inner + i          # logical block index along the row axis
    else:
        i = pl.program_id(0)
        blk = i

    @pl.when(i == 0)
    def _init():
        acc_ref[...] = jnp.zeros_like(acc_ref)

    pt = cls_ref[...].astype(jnp.float32)
    r = reg_ref[...].astype(jnp.float32)
    t = tgt_ref[...].astype(jnp.float32)

    flood = t > 0.0                  # label_reg2cls(targets)
    flood_f = flood.astype(jnp.float32)

    one_m_pt = 1.0 - pt
    if gamma == 2.0:                 # fast path: explicit squares
        pos_pow = one_m_pt * one_m_pt
        neg_pow = pt * pt
    else:
        pos_pow = one_m_pt ** gamma
        neg_pow = pt ** gamma

    # One log per element; the minus sign is folded into the coefficient.
    coeff = jnp.where(flood, (-alpha) * pos_pow, (alpha - 1.0) * neg_pow)
    arg = jnp.where(flood, pt, one_m_pt)
    focal = coeff * jnp.log(jnp.abs(arg) + eps)

    d = r - t
    d2 = d * d

    def accum(focal_t, d2_all_t, d2_flood_t, cnt_flood_t):
        # Sublane-splitting reshape keeps (8,128) vreg tiles intact -> pure
        # VPU vreg adds (no XLU cross-lane work inside the hot loop).
        def part(x):
            return jnp.sum(x.reshape(tile_rows // SUBLANES, SUBLANES, LANES),
                           axis=0)
        acc_ref[0, 0] += part(focal_t)
        acc_ref[0, 1] += part(d2_all_t)
        acc_ref[0, 2] += part(d2_flood_t)
        acc_ref[0, 3] += part(cnt_flood_t)

    is_clean = blk < num_clean       # block lies fully inside the real rows

    @pl.when(is_clean)
    def _clean():
        # All data is real (no padding anywhere), so no mask is needed and the
        # flood select reuses the mask already computed for the count.
        accum(focal, d2, d2 * flood_f, flood_f)

    @pl.when(jnp.logical_not(is_clean))
    def _tail():
        # Partial last block (Pallas-padded garbage rows) or a duplicated
        # block from the core split: mask at row granularity with selects
        # (NaN/Inf-safe against garbage).  Row-granular compares also avoid
        # int32 overflow for any realistic element count.
        row = jax.lax.broadcasted_iota(jnp.int32, (tile_rows, LANES), 0)
        valid = (blk * tile_rows + row) < total_rows
        fvalid = jnp.logical_and(flood, valid)
        accum(jnp.where(valid, focal, 0.0),
              jnp.where(valid, d2, 0.0),
              jnp.where(fvalid, d2, 0.0),
              fvalid.astype(jnp.float32))


def _kernel_stats(cls2, reg2, tgt2, gamma, alpha):
    """Runs the Pallas kernel over (rows, 128) slabs; returns the 4 sums."""
    rows = cls2.shape[0]                       # multiple of 8 by construction
    tile_rows = min(MAX_TILE_ROWS, rows)
    total_blocks = pl.cdiv(rows, tile_rows)
    num_clean = rows // tile_rows              # blocks with no padded tail

    num_tc = _num_tensorcores_per_device()
    split = num_tc > 1 and total_blocks >= MIN_BLOCKS_FOR_SPLIT
    num_splits = num_tc if split else 1

    if split:
        inner = pl.cdiv(total_blocks, num_splits)
        grid = (num_splits, inner)

        def in_map(c, i):
            # Clamp so the (at most one) duplicated tail grid point never
            # indexes past the array; its contribution is masked in-kernel.
            return (jnp.minimum(c * inner + i, total_blocks - 1), 0)

        out_map = lambda c, i: (c, 0, 0, 0)
        semantics = (pltpu.CORE_PARALLEL, pltpu.ARBITRARY)
    else:
        inner = total_blocks
        grid = (total_blocks,)
        in_map = lambda i: (i, 0)
        out_map = lambda i: (0, 0, 0, 0)
        semantics = ("arbitrary",)

    kernel = functools.partial(
        _loss_sums_kernel, gamma=float(gamma), alpha=float(alpha), eps=EPS,
        total_rows=rows, tile_rows=tile_rows, inner=inner,
        num_clean=num_clean, split=split)

    in_spec = pl.BlockSpec((tile_rows, LANES), in_map)
    out_spec = pl.BlockSpec((1, 4, SUBLANES, LANES), out_map)

    partials = pl.pallas_call(
        kernel,
        out_shape=jax.ShapeDtypeStruct((num_splits, 4, SUBLANES, LANES),
                                       jnp.float32),
        grid=grid,
        in_specs=[in_spec, in_spec, in_spec],
        out_specs=out_spec,
        compiler_params=pltpu.CompilerParams(
            dimension_semantics=semantics,
            vmem_limit_bytes=VMEM_LIMIT_BYTES),
    )(cls2, reg2, tgt2)

    stats = jnp.sum(partials, axis=(0, 2, 3))  # final cross-lane reduce, (4,)
    return stats[0], stats[1], stats[2], stats[3]


def _jnp_stats(pt, r, t, gamma, alpha):
    """Same 4 sums computed with plain jnp (for the tiny unaligned remainder)."""
    pt = pt.astype(jnp.float32)
    r = r.astype(jnp.float32)
    t = t.astype(jnp.float32)
    flood = t > 0.0
    flood_f = flood.astype(jnp.float32)
    focal = (-alpha * (1.0 - pt) ** gamma * flood_f * jnp.log(jnp.abs(pt) + EPS)
             - (1.0 - alpha) * pt ** gamma * (1.0 - flood_f)
             * jnp.log(jnp.abs(1.0 - pt) + EPS))
    d2 = (r - t) ** 2
    return (jnp.sum(focal), jnp.sum(d2),
            jnp.sum(jnp.where(flood, d2, 0.0)), jnp.sum(flood_f))


def focal_bce_and_wmse(inputs, targets, epoch, *, gamma=2.0, alpha=0.25,
                       reg_weight=2, reduction='mean'):
    """JAX/Pallas equivalent of FocalBCE_and_WMSE.forward (reduction='mean')."""
    del reg_weight  # accepted for signature parity; unused by the torch forward
    if reduction != 'mean':
        # TODO(synk): 'none'/'sum' reductions of the torch module are not implemented.
        raise NotImplementedError("only reduction='mean' is supported")

    cls_f = inputs['cls'].reshape(-1)
    reg_f = inputs['reg'].reshape(-1)
    tgt_f = targets.reshape(-1)

    n = tgt_f.shape[0]
    n_main = (n // CHUNK) * CHUNK           # largest 1024-aligned prefix
    rem = n - n_main

    zero = jnp.float32(0.0)
    focal_sum = d2_all = d2_flood = flood_cnt = zero

    if n_main:
        def prep(flat):
            if rem:                          # prefix slice only when misaligned
                flat = flat[:n_main]
            return flat.reshape(-1, LANES)   # pure reshape, no pad copy
        fs, da, df, fc = _kernel_stats(prep(cls_f), prep(reg_f), prep(tgt_f),
                                       gamma, alpha)
        focal_sum += fs; d2_all += da; d2_flood += df; flood_cnt += fc

    if rem:
        fs, da, df, fc = _jnp_stats(cls_f[n_main:], reg_f[n_main:],
                                    tgt_f[n_main:], gamma, alpha)
        focal_sum += fs; d2_all += da; d2_flood += df; flood_cnt += fc

    n_f = jnp.float32(n)
    unflood_cnt = n_f - flood_cnt
    d2_unflood = d2_all - d2_flood

    # reduction == 'mean' semantics (torch.mean / F.mse_loss('mean')).
    loss_cls = focal_sum / n_f
    loss_reg_flood = d2_flood / flood_cnt        # NaN if no flood elems (matches torch)
    loss_reg_unflood = d2_unflood / unflood_cnt  # NaN if no unflood elems (matches torch)
    loss_reg = 20.0 * loss_reg_flood + loss_reg_unflood

    if isinstance(epoch, (int, float)):
        cls_w = 10.0 if epoch < 500 else 0.1
    else:                                        # traced epoch also supported
        cls_w = jnp.where(epoch < 500, 10.0, 0.1)
    loss = loss_reg + cls_w * loss_cls

    return {
        'loss': loss,
        'loss_reg': loss_reg,
        'loss_reg_label': loss_reg_flood,
        'loss_reg_pred': loss_reg_unflood,
        'loss_cls': loss_cls,
    }


def _reference(inputs, targets, epoch, gamma=2.0, alpha=0.25):
    """Pure-JAX reference mirroring the PyTorch forward."""
    pt = inputs['cls'].astype(jnp.float32)
    r = inputs['reg'].astype(jnp.float32)
    t = targets.astype(jnp.float32)
    cls_t = (t > 0).astype(jnp.float32)
    focal = (-alpha * (1 - pt) ** gamma * cls_t * jnp.log(jnp.abs(pt) + EPS)
             - (1 - alpha) * pt ** gamma * (1 - cls_t)
             * jnp.log(jnp.abs(1 - pt) + EPS))
    loss_cls = jnp.mean(focal)
    flood = t > 0
    d2 = (r - t) ** 2
    flood_loss = jnp.sum(jnp.where(flood, d2, 0.0)) / jnp.sum(flood)
    unflood_loss = jnp.sum(jnp.where(flood, 0.0, d2)) / jnp.sum(~flood)
    loss_reg = 20.0 * flood_loss + unflood_loss
    w = 10.0 if epoch < 500 else 0.1
    return {
        'loss': loss_reg + w * loss_cls,
        'loss_reg': loss_reg,
        'loss_reg_label': flood_loss,
        'loss_reg_pred': unflood_loss,
        'loss_cls': loss_cls,
    }


if __name__ == "__main__":
    key = jax.random.PRNGKey(0)

    def make_case(shape, k):
        k1, k2, k3 = jax.random.split(k, 3)
        cls_probs = jax.random.uniform(k1, shape, jnp.float32,
                                       minval=1e-3, maxval=1.0 - 1e-3)
        reg_pred = jax.random.normal(k2, shape, jnp.float32)
        tgt = jax.random.normal(k3, shape, jnp.float32)
        return {'cls': cls_probs, 'reg': reg_pred}, tgt

    cases = [
        ((2, 4, 16, 16), 1),      # small NCHW: single clean block
        ((2, 4, 176, 192), 1),    # multi-block with a partial (masked) tail block
        ((2, 3, 177, 191), 600),  # unaligned numel -> jnp remainder; epoch >= 500
    ]

    keys = jax.random.split(key, len(cases))
    for (shape, epoch), k in zip(cases, keys):
        inputs, tgt = make_case(shape, k)
        out = focal_bce_and_wmse(inputs, tgt, epoch)
        out = jax.tree_util.tree_map(jax.block_until_ready, out)
        ref = _reference(inputs, tgt, epoch)
        for name in out:
            assert jnp.allclose(out[name], ref[name], rtol=1e-4, atol=1e-6), (
                shape, name, out[name], ref[name])

    print("KERNEL_OK")
</pallas_src>

<mosaic_0001>
module attributes {stable_mosaic.version = 11 : i64} {
  func.func @_loss_sums_kernel(%arg0: i32, %arg1: memref<16x128xf32, #tpu.memory_space<vmem>>, %arg2: memref<16x128xf32, #tpu.memory_space<vmem>>, %arg3: memref<16x128xf32, #tpu.memory_space<vmem>>, %arg4: memref<1x4x8x128xf32, #tpu.memory_space<vmem>>) attributes {dimension_semantics = [#tpu.dimension_semantics<arbitrary>], iteration_bounds = array<i64: 1>, scalar_prefetch = 0 : i64, scratch_operands = 0 : i64, tpu.core_type = #tpu.core_type<tc>, window_params = [{transform_indices = @transform_0, window_bounds = array<i64: 16, 128>}, {transform_indices = @transform_1, window_bounds = array<i64: 16, 128>}, {transform_indices = @transform_2, window_bounds = array<i64: 16, 128>}, {pipeline_mode = #tpu.pipeline_mode<synchronous>, transform_indices = @transform_3, window_bounds = array<i64: 1, 4, 8, 128>}]} {
    %c0_i32 = arith.constant 0 : i32
    %0 = arith.cmpi eq, %arg0, %c0_i32 : i32
    %1 = arith.extui %0 : i1 to i32
    %c0_i32_0 = arith.constant 0 : i32
    %2 = arith.cmpi ne, %1, %c0_i32_0 : i32
    scf.if %2 {
      %cst_12 = arith.constant 0.000000e+00 : f32
      %33 = vector.broadcast %cst_12 : f32 to vector<1x4x8x128xf32>
      %c0_13 = arith.constant 0 : index
      %c0_14 = arith.constant 0 : index
      %c0_15 = arith.constant 0 : index
      %c0_16 = arith.constant 0 : index
      %34 = vector.load %arg4[%c0_13, %c0_14, %c0_15, %c0_16] : memref<1x4x8x128xf32, #tpu.memory_space<vmem>>, vector<1x4x8x128xf32>
      tpu.vector_store %arg4[%c0_13, %c0_14, %c0_15, %c0_16], %33 {strides = array<i32>} : memref<1x4x8x128xf32, #tpu.memory_space<vmem>>, vector<1x4x8x128xf32>,
    } else {
    }
    %c0 = arith.constant 0 : index
    %c0_1 = arith.constant 0 : index
    %3 = vector.load %arg1[%c0, %c0_1] : memref<16x128xf32, #tpu.memory_space<vmem>>, vector<16x128xf32>
    %c0_2 = arith.constant 0 : index
    %c0_3 = arith.constant 0 : index
    %4 = vector.load %arg2[%c0_2, %c0_3] : memref<16x128xf32, #tpu.memory_space<vmem>>, vector<16x128xf32>
    %c0_4 = arith.constant 0 : index
    %c0_5 = arith.constant 0 : index
    %5 = vector.load %arg3[%c0_4, %c0_5] : memref<16x128xf32, #tpu.memory_space<vmem>>, vector<16x128xf32>
    %cst = arith.constant 0.000000e+00 : f32
    %6 = vector.broadcast %cst : f32 to vector<16x128xf32>
    %7 = arith.cmpf ogt, %5, %6 : vector<16x128xf32>
    %8 = arith.extui %7 : vector<16x128xi1> to vector<16x128xi32>
    %9 = arith.sitofp %8 : vector<16x128xi32> to vector<16x128xf32>
    %cst_6 = arith.constant 1.000000e+00 : f32
    %10 = vector.broadcast %cst_6 : f32 to vector<16x128xf32>
    %11 = arith.subf %10, %3 : vector<16x128xf32>
    %12 = arith.mulf %11, %11 : vector<16x128xf32>
    %13 = arith.mulf %3, %3 : vector<16x128xf32>
    %cst_7 = arith.constant -2.500000e-01 : f32
    %14 = vector.broadcast %cst_7 : f32 to vector<16x128xf32>
    %15 = arith.mulf %14, %12 : vector<16x128xf32>
    %cst_8 = arith.constant -7.500000e-01 : f32
    %16 = vector.broadcast %cst_8 : f32 to vector<16x128xf32>
    %17 = arith.mulf %16, %13 : vector<16x128xf32>
    %18 = arith.select %7, %15, %17 : vector<16x128xi1>, vector<16x128xf32>
    %19 = arith.select %7, %3, %11 : vector<16x128xi1>, vector<16x128xf32>
    %20 = math.absf %19 : vector<16x128xf32>
    %cst_9 = arith.constant 9.99999971E-10 : f32
    %21 = vector.broadcast %cst_9 : f32 to vector<16x128xf32>
    %22 = arith.addf %20, %21 : vector<16x128xf32>
    %23 = math.log %22 : vector<16x128xf32>
    %24 = arith.mulf %18, %23 : vector<16x128xf32>
    %25 = arith.subf %4, %5 : vector<16x128xf32>
    %26 = arith.mulf %25, %25 : vector<16x128xf32>
    %c1_i32 = arith.constant 1 : i32
    %27 = arith.cmpi slt, %arg0, %c1_i32 : i32
    %28 = arith.extui %27 : i1 to i32
    %c0_i32_10 = arith.constant 0 : i32
    %29 = arith.cmpi ne, %28, %c0_i32_10 : i32
    scf.if %29 {
      %33 = arith.mulf %26, %9 : vector<16x128xf32>
      %c0_12 = arith.constant 0 : index
      %c0_13 = arith.constant 0 : index
      %c0_14 = arith.constant 0 : index
      %c0_15 = arith.constant 0 : index
      %34 = vector.load %arg4[%c0_12, %c0_13, %c0_14, %c0_15] : memref<1x4x8x128xf32, #tpu.memory_space<vmem>>, vector<1x1x8x128xf32>
      %35 = vector.shape_cast %34 : vector<1x1x8x128xf32> to vector<8x128xf32>
      %36 = vector.shape_cast %24 : vector<16x128xf32> to vector<2x8x128xf32>
      %cst_16 = arith.constant dense<0.000000e+00> : vector<8x128xf32>
      %37 = vector.multi_reduction <add>, %36, %cst_16 [0] : vector<2x8x128xf32> to vector<8x128xf32>
      %38 = arith.addf %35, %37 : vector<8x128xf32>
      %c0_17 = arith.constant 0 : index
      %c0_18 = arith.constant 0 : index
      %c0_19 = arith.constant 0 : index
      %c0_20 = arith.constant 0 : index
      %39 = vector.load %arg4[%c0_17, %c0_18, %c0_19, %c0_20] : memref<1x4x8x128xf32, #tpu.memory_space<vmem>>, vector<1x1x8x128xf32>
      %40 = vector.shape_cast %39 : vector<1x1x8x128xf32> to vector<8x128xf32>
      %41 = vector.shape_cast %38 : vector<8x128xf32> to vector<1x1x8x128xf32>
      tpu.vector_store %arg4[%c0_17, %c0_18, %c0_19, %c0_20], %41 {strides = array<i32>} : memref<1x4x8x128xf32, #tpu.memory_space<vmem>>, vector<1x1x8x128xf32>,
      %c0_21 = arith.constant 0 : index
      %c1 = arith.constant 1 : index
      %c0_22 = arith.constant 0 : index
      %c0_23 = arith.constant 0 : index
      %42 = vector.load %arg4[%c0_21, %c1, %c0_22, %c0_23] : memref<1x4x8x128xf32, #tpu.memory_space<vmem>>, vector<1x1x8x128xf32>
      %43 = vector.shape_cast %42 : vector<1x1x8x128xf32> to vector<8x128xf32>
      %44 = vector.shape_cast %26 : vector<16x128xf32> to vector<2x8x128xf32>
      %cst_24 = arith.constant dense<0.000000e+00> : vector<8x128xf32>
      %45 = vector.multi_reduction <add>, %44, %cst_24 [0] : vector<2x8x128xf32> to vector<8x128xf32>
      %46 = arith.addf %43, %45 : vector<8x128xf32>
      %c0_25 = arith.constant 0 : index
      %c1_26 = arith.constant 1 : index
      %c0_27 = arith.constant 0 : index
      %c0_28 = arith.constant 0 : index
      %47 = vector.load %arg4[%c0_25, %c1_26, %c0_27, %c0_28] : memref<1x4x8x128xf32, #tpu.memory_space<vmem>>, vector<1x1x8x128xf32>
      %48 = vector.shape_cast %47 : vector<1x1x8x128xf32> to vector<8x128xf32>
      %49 = vector.shape_cast %46 : vector<8x128xf32> to vector<1x1x8x128xf32>
      tpu.vector_store %arg4[%c0_25, %c1_26, %c0_27, %c0_28], %49 {strides = array<i32>} : memref<1x4x8x128xf32, #tpu.memory_space<vmem>>, vector<1x1x8x128xf32>,
      %c0_29 = arith.constant 0 : index
      %c2 = arith.constant 2 : index
      %c0_30 = arith.constant 0 : index
      %c0_31 = arith.constant 0 : index
      %50 = vector.load %arg4[%c0_29, %c2, %c0_30, %c0_31] : memref<1x4x8x128xf32, #tpu.memory_space<vmem>>, vector<1x1x8x128xf32>
      %51 = vector.shape_cast %50 : vector<1x1x8x128xf32> to vector<8x128xf32>
      %52 = vector.shape_cast %33 : vector<16x128xf32> to vector<2x8x128xf32>
      %cst_32 = arith.constant dense<0.000000e+00> : vector<8x128xf32>
      %53 = vector.multi_reduction <add>, %52, %cst_32 [0] : vector<2x8x128xf32> to vector<8x128xf32>
      %54 = arith.addf %51, %53 : vector<8x128xf32>
      %c0_33 = arith.constant 0 : index
      %c2_34 = arith.constant 2 : index
      %c0_35 = arith.constant 0 : index
      %c0_36 = arith.constant 0 : index
      %55 = vector.load %arg4[%c0_33, %c2_34, %c0_35, %c0_36] : memref<1x4x8x128xf32, #tpu.memory_space<vmem>>, vector<1x1x8x128xf32>
      %56 = vector.shape_cast %55 : vector<1x1x8x128xf32> to vector<8x128xf32>
      %57 = vector.shape_cast %54 : vector<8x128xf32> to vector<1x1x8x128xf32>
      tpu.vector_store %arg4[%c0_33, %c2_34, %c0_35, %c0_36], %57 {strides = array<i32>} : memref<1x4x8x128xf32, #tpu.memory_space<vmem>>, vector<1x1x8x128xf32>,
      %c0_37 = arith.constant 0 : index
      %c3 = arith.constant 3 : index
      %c0_38 = arith.constant 0 : index
      %c0_39 = arith.constant 0 : index
      %58 = vector.load %arg4[%c0_37, %c3, %c0_38, %c0_39] : memref<1x4x8x128xf32, #tpu.memory_space<vmem>>, vector<1x1x8x128xf32>
      %59 = vector.shape_cast %58 : vector<1x1x8x128xf32> to vector<8x128xf32>
      %60 = vector.shape_cast %9 : vector<16x128xf32> to vector<2x8x128xf32>
      %cst_40 = arith.constant dense<0.000000e+00> : vector<8x128xf32>
      %61 = vector.multi_reduction <add>, %60, %cst_40 [0] : vector<2x8x128xf32> to vector<8x128xf32>
      %62 = arith.addf %59, %61 : vector<8x128xf32>
      %c0_41 = arith.constant 0 : index
      %c3_42 = arith.constant 3 : index
      %c0_43 = arith.constant 0 : index
      %c0_44 = arith.constant 0 : index
      %63 = vector.load %arg4[%c0_41, %c3_42, %c0_43, %c0_44] : memref<1x4x8x128xf32, #tpu.memory_space<vmem>>, vector<1x1x8x128xf32>
      %64 = vector.shape_cast %63 : vector<1x1x8x128xf32> to vector<8x128xf32>
      %65 = vector.shape_cast %62 : vector<8x128xf32> to vector<1x1x8x128xf32>
      tpu.vector_store %arg4[%c0_41, %c3_42, %c0_43, %c0_44], %65 {strides = array<i32>} : memref<1x4x8x128xf32, #tpu.memory_space<vmem>>, vector<1x1x8x128xf32>,
    } else {
    }
    %true = arith.constant true
    %30 = arith.xori %27, %true : i1
    %31 = arith.extui %30 : i1 to i32
    %c0_i32_11 = arith.constant 0 : i32
    %32 = arith.cmpi ne, %31, %c0_i32_11 : i32
    scf.if %32 {
      %33 = tpu.iota {dimensions = array<i32: 0>} : vector<16x128xi32>
      %c16_i32 = arith.constant 16 : i32
      %34 = arith.muli %arg0, %c16_i32 : i32
      %35 = vector.broadcast %34 : i32 to vector<16x128xi32>
      %36 = arith.addi %35, %33 : vector<16x128xi32>
      %c16_i32_12 = arith.constant 16 : i32
      %37 = vector.broadcast %c16_i32_12 : i32 to vector<16x128xi32>
      %38 = arith.cmpi slt, %36, %37 : vector<16x128xi32>
      %39 = arith.andi %7, %38 : vector<16x128xi1>
      %cst_13 = arith.constant 0.000000e+00 : f32
      %40 = vector.broadcast %cst_13 : f32 to vector<16x128xf32>
      %41 = arith.select %38, %24, %40 : vector<16x128xi1>, vector<16x128xf32>
      %cst_14 = arith.constant 0.000000e+00 : f32
      %42 = vector.broadcast %cst_14 : f32 to vector<16x128xf32>
      %43 = arith.select %38, %26, %42 : vector<16x128xi1>, vector<16x128xf32>
      %cst_15 = arith.constant 0.000000e+00 : f32
      %44 = vector.broadcast %cst_15 : f32 to vector<16x128xf32>
      %45 = arith.select %39, %26, %44 : vector<16x128xi1>, vector<16x128xf32>
      %46 = arith.extui %39 : vector<16x128xi1> to vector<16x128xi32>
      %47 = arith.sitofp %46 : vector<16x128xi32> to vector<16x128xf32>
      %c0_16 = arith.constant 0 : index
      %c0_17 = arith.constant 0 : index
      %c0_18 = arith.constant 0 : index
      %c0_19 = arith.constant 0 : index
      %48 = vector.load %arg4[%c0_16, %c0_17, %c0_18, %c0_19] : memref<1x4x8x128xf32, #tpu.memory_space<vmem>>, vector<1x1x8x128xf32>
      %49 = vector.shape_cast %48 : vector<1x1x8x128xf32> to vector<8x128xf32>
      %50 = vector.shape_cast %41 : vector<16x128xf32> to vector<2x8x128xf32>
      %cst_20 = arith.constant dense<0.000000e+00> : vector<8x128xf32>
      %51 = vector.multi_reduction <add>, %50, %cst_20 [0] : vector<2x8x128xf32> to vector<8x128xf32>
      %52 = arith.addf %49, %51 : vector<8x128xf32>
      %c0_21 = arith.constant 0 : index
      %c0_22 = arith.constant 0 : index
      %c0_23 = arith.constant 0 : index
      %c0_24 = arith.constant 0 : index
      %53 = vector.load %arg4[%c0_21, %c0_22, %c0_23, %c0_24] : memref<1x4x8x128xf32, #tpu.memory_space<vmem>>, vector<1x1x8x128xf32>
      %54 = vector.shape_cast %53 : vector<1x1x8x128xf32> to vector<8x128xf32>
      %55 = vector.shape_cast %52 : vector<8x128xf32> to vector<1x1x8x128xf32>
      tpu.vector_store %arg4[%c0_21, %c0_22, %c0_23, %c0_24], %55 {strides = array<i32>} : memref<1x4x8x128xf32, #tpu.memory_space<vmem>>, vector<1x1x8x128xf32>,
      %c0_25 = arith.constant 0 : index
      %c1 = arith.constant 1 : index
      %c0_26 = arith.constant 0 : index
      %c0_27 = arith.constant 0 : index
      %56 = vector.load %arg4[%c0_25, %c1, %c0_26, %c0_27] : memref<1x4x8x128xf32, #tpu.memory_space<vmem>>, vector<1x1x8x128xf32>
      %57 = vector.shape_cast %56 : vector<1x1x8x128xf32> to vector<8x128xf32>
      %58 = vector.shape_cast %43 : vector<16x128xf32> to vector<2x8x128xf32>
      %cst_28 = arith.constant dense<0.000000e+00> : vector<8x128xf32>
      %59 = vector.multi_reduction <add>, %58, %cst_28 [0] : vector<2x8x128xf32> to vector<8x128xf32>
      %60 = arith.addf %57, %59 : vector<8x128xf32>
      %c0_29 = arith.constant 0 : index
      %c1_30 = arith.constant 1 : index
      %c0_31 = arith.constant 0 : index
      %c0_32 = arith.constant 0 : index
      %61 = vector.load %arg4[%c0_29, %c1_30, %c0_31, %c0_32] : memref<1x4x8x128xf32, #tpu.memory_space<vmem>>, vector<1x1x8x128xf32>
      %62 = vector.shape_cast %61 : vector<1x1x8x128xf32> to vector<8x128xf32>
      %63 = vector.shape_cast %60 : vector<8x128xf32> to vector<1x1x8x128xf32>
      tpu.vector_store %arg4[%c0_29, %c1_30, %c0_31, %c0_32], %63 {strides = array<i32>} : memref<1x4x8x128xf32, #tpu.memory_space<vmem>>, vector<1x1x8x128xf32>,
      %c0_33 = arith.constant 0 : index
      %c2 = arith.constant 2 : index
      %c0_34 = arith.constant 0 : index
      %c0_35 = arith.constant 0 : index
      %64 = vector.load %arg4[%c0_33, %c2, %c0_34, %c0_35] : memref<1x4x8x128xf32, #tpu.memory_space<vmem>>, vector<1x1x8x128xf32>
      %65 = vector.shape_cast %64 : vector<1x1x8x128xf32> to vector<8x128xf32>
      %66 = vector.shape_cast %45 : vector<16x128xf32> to vector<2x8x128xf32>
      %cst_36 = arith.constant dense<0.000000e+00> : vector<8x128xf32>
      %67 = vector.multi_reduction <add>, %66, %cst_36 [0] : vector<2x8x128xf32> to vector<8x128xf32>
      %68 = arith.addf %65, %67 : vector<8x128xf32>
      %c0_37 = arith.constant 0 : index
      %c2_38 = arith.constant 2 : index
      %c0_39 = arith.constant 0 : index
      %c0_40 = arith.constant 0 : index
      %69 = vector.load %arg4[%c0_37, %c2_38, %c0_39, %c0_40] : memref<1x4x8x128xf32, #tpu.memory_space<vmem>>, vector<1x1x8x128xf32>
      %70 = vector.shape_cast %69 : vector<1x1x8x128xf32> to vector<8x128xf32>
      %71 = vector.shape_cast %68 : vector<8x128xf32> to vector<1x1x8x128xf32>
      tpu.vector_store %arg4[%c0_37, %c2_38, %c0_39, %c0_40], %71 {strides = array<i32>} : memref<1x4x8x128xf32, #tpu.memory_space<vmem>>, vector<1x1x8x128xf32>,
      %c0_41 = arith.constant 0 : index
      %c3 = arith.constant 3 : index
      %c0_42 = arith.constant 0 : index
      %c0_43 = arith.constant 0 : index
      %72 = vector.load %arg4[%c0_41, %c3, %c0_42, %c0_43] : memref<1x4x8x128xf32, #tpu.memory_space<vmem>>, vector<1x1x8x128xf32>
      %73 = vector.shape_cast %72 : vector<1x1x8x128xf32> to vector<8x128xf32>
      %74 = vector.shape_cast %47 : vector<16x128xf32> to vector<2x8x128xf32>
      %cst_44 = arith.constant dense<0.000000e+00> : vector<8x128xf32>
      %75 = vector.multi_reduction <add>, %74, %cst_44 [0] : vector<2x8x128xf32> to vector<8x128xf32>
      %76 = arith.addf %73, %75 : vector<8x128xf32>
      %c0_45 = arith.constant 0 : index
      %c3_46 = arith.constant 3 : index
      %c0_47 = arith.constant 0 : index
      %c0_48 = arith.constant 0 : index
      %77 = vector.load %arg4[%c0_45, %c3_46, %c0_47, %c0_48] : memref<1x4x8x128xf32, #tpu.memory_space<vmem>>, vector<1x1x8x128xf32>
      %78 = vector.shape_cast %77 : vector<1x1x8x128xf32> to vector<8x128xf32>
      %79 = vector.shape_cast %76 : vector<8x128xf32> to vector<1x1x8x128xf32>
      tpu.vector_store %arg4[%c0_45, %c3_46, %c0_47, %c0_48], %79 {strides = array<i32>} : memref<1x4x8x128xf32, #tpu.memory_space<vmem>>, vector<1x1x8x128xf32>,
    } else {
    }
    return
  }
  func.func @transform_0(%arg0: i32) -> (i32, i32) {
    %c0_i32 = arith.constant 0 : i32
    %c0_i32_0 = arith.constant 0 : i32
    return %arg0, %c0_i32 : i32, i32
  }
  func.func @transform_1(%arg0: i32) -> (i32, i32) {
    %c0_i32 = arith.constant 0 : i32
    %c0_i32_0 = arith.constant 0 : i32
    return %arg0, %c0_i32 : i32, i32
  }
  func.func @transform_2(%arg0: i32) -> (i32, i32) {
    %c0_i32 = arith.constant 0 : i32
    %c0_i32_0 = arith.constant 0 : i32
    return %arg0, %c0_i32 : i32, i32
  }
  func.func @transform_3(%arg0: i32) -> (i32, i32, i32, i32) {
    %c0_i32 = arith.constant 0 : i32
    %c0_i32_0 = arith.constant 0 : i32
    %c0_i32_1 = arith.constant 0 : i32
    %c0_i32_2 = arith.constant 0 : i32
    %c0_i32_3 = arith.constant 0 : i32
    return %c0_i32, %c0_i32_0, %c0_i32_1, %c0_i32_2 : i32, i32, i32, i32
  }
}

</mosaic_0001>

<llo_original>
// kernel: tpu_custom_call.1
$region0: #{tpu_custom_call.1}
  #allocation0 [shape = 'u32[]', space=smem, size = 0x4, offset = 0x4, fixed_abs, tag = 'smem constant byte address 0x4 - core index']
  #allocation1 [shape = 'u32[72,128]{1,0:T(1,128)}', space=vmem, size = 0x9000, scoped, tag = 'internal scratch']
  %s0 = inlined_call_operand.hbm [shape: f32[16,128], index: 0, kind: input, shape index: {}]
  %s1 = inlined_call_operand.hbm [shape: f32[16,128], index: 1, kind: input, shape index: {}]
  %s2 = inlined_call_operand.hbm [shape: f32[16,128], index: 2, kind: input, shape index: {}]
  %s3 = inlined_call_operand.hbm [shape: f32[1,4,8,128], index: 3, kind: output, shape index: {}]
  %s4 = sld [smem:[#allocation0]]
  $region46: #{tpu_custom_call.1} parent=0
    _
  %s6 = ssub.s32 1, %s4
  %s7 = scalar_select 0, %s6, %s4
  $region1: #{tpu_custom_call.1} parent=0
    #allocation2 [shape = 'u8[8192]{0}', space=vmem, size = 0x2000, scoped, tag = 'input window, operand 0, single buffered']
    #allocation3 [shape = 's32[1]{0}', space=sflag, size = 0x4, scoped, tag = 'scoped memory for tpu_custom_call.1']
    #allocation4 [shape = 's32[1]{0}', space=sflag, size = 0x4, scoped, tag = 'scoped memory for tpu_custom_call.1']
    #allocation5 [shape = 'u8[8192]{0}', space=vmem, size = 0x2000, scoped, tag = 'input window, operand 1, single buffered']
    #allocation6 [shape = 's32[1]{0}', space=sflag, size = 0x4, scoped, tag = 'scoped memory for tpu_custom_call.1']
    #allocation7 [shape = 'u8[8192]{0}', space=vmem, size = 0x2000, scoped, tag = 'input window, operand 2, single buffered']
    #allocation8 [shape = 'u8[16384]{0}', space=vmem, size = 0x4000, scoped, tag = 'output window, operand 0, single buffered']
    %8 = vsyncpa [#allocation3], 0
    %9 = vsyncpa [#allocation6], 0
    %10 = vsyncpa [#allocation4], 0
    // Predicated region
    $region2: #{tpu_custom_call.1} parent=1 // pred_check
      _
    $region3: #{tpu_custom_call.1} parent=1 // pred_check_branch
      %12 = sbr.rel (0) target = $region5
    $region4: #{tpu_custom_call.1} parent=1 // pred_region
      %14 = vsyncadd [#allocation3], 0
      %s15 = sshll.u32 %s0, 4
      %s16 = int_to_ptr.hbm [resolvable:$true] %s15
      %s17 = sshll.u32 [#allocation2], 4
      %s18 = int_to_ptr.vmem [resolvable:$true] %s17
      %23 = dma.hbm_to_vmem [thread:$0]  %s16, 256, %s18, [#allocation3], 128, 128, 8
    $region5: #{tpu_custom_call.1} parent=1 // pred_fallthru
      _
    // Predicated region
    $region6: #{tpu_custom_call.1} parent=1 // pred_check
      _
    $region7: #{tpu_custom_call.1} parent=1 // pred_check_branch
      %25 = sbr.rel (0) target = $region9
    $region8: #{tpu_custom_call.1} parent=1 // pred_region
      %27 = vsyncadd [#allocation6], 0
      %s28 = sshll.u32 %s1, 4
      %s29 = int_to_ptr.hbm [resolvable:$true] %s28
      %s30 = sshll.u32 [#allocation5], 4
      %s31 = int_to_ptr.vmem [resolvable:$true] %s30
      %36 = dma.hbm_to_vmem [thread:$0]  %s29, 256, %s31, [#allocation6], 128, 128, 8
    $region9: #{tpu_custom_call.1} parent=1 // pred_fallthru
      _
    // Predicated region
    $region10: #{tpu_custom_call.1} parent=1 // pred_check
      _
    $region11: #{tpu_custom_call.1} parent=1 // pred_check_branch
      %38 = sbr.rel (0) target = $region13
    $region12: #{tpu_custom_call.1} parent=1 // pred_region
      %40 = vsyncadd [#allocation6], 0
      %s41 = sshll.u32 %s2, 4
      %s42 = int_to_ptr.hbm [resolvable:$true] %s41
      %s43 = sshll.u32 [#allocation7], 4
      %s44 = int_to_ptr.vmem [resolvable:$true] %s43
      %49 = dma.hbm_to_vmem [thread:$0]  %s42, 256, %s44, [#allocation6], 128, 128, 8
    $region13: #{tpu_custom_call.1} parent=1 // pred_fallthru
      _
    // Predicated region
    $region14: #{tpu_custom_call.1} parent=1 // pred_check
      _
    $region15: #{tpu_custom_call.1} parent=1 // pred_check_branch
      %51 = sbr.rel (0) target = $region17
    $region16: #{tpu_custom_call.1} parent=1 // pred_region
      %53 = dma.done [#allocation3], 256
    $region17: #{tpu_custom_call.1} parent=1 // pred_fallthru
      _
    // Predicated region
    $region18: #{tpu_custom_call.1} parent=1 // pred_check
      _
    $region19: #{tpu_custom_call.1} parent=1 // pred_check_branch
      %55 = sbr.rel (0) target = $region21
    $region20: #{tpu_custom_call.1} parent=1 // pred_region
      %57 = dma.done [#allocation6], 256
    $region21: #{tpu_custom_call.1} parent=1 // pred_fallthru
      _
    // Predicated region
    $region22: #{tpu_custom_call.1} parent=1 // pred_check
      _
    $region23: #{tpu_custom_call.1} parent=1 // pred_check_branch
      %59 = sbr.rel (0) target = $region25
    $region24: #{tpu_custom_call.1} parent=1 // pred_region
      %61 = dma.done [#allocation6], 256
    $region25: #{tpu_custom_call.1} parent=1 // pred_fallthru
      _
    %p62 = scmp.eq.s32.totalorder 0, 0
    // Predicated region
    $region26: #{tpu_custom_call.1} parent=1 // pred_check
      %p63 = pneg %p62
    $region27: #{tpu_custom_call.1} parent=1 // pred_check_branch
      %65 = sbr.rel (%p63) target = $region29
    $region28: #{tpu_custom_call.1} parent=1 // pred_region
      %66 = vst [vmem:[#allocation8] sm:$0xff] 0.0
      %67 = vst [vmem:[#allocation8 + $0x8] sm:$0xff] 0.0
      %68 = vst [vmem:[#allocation8 + $0x10] sm:$0xff] 0.0
      %69 = vst [vmem:[#allocation8 + $0x18] sm:$0xff] 0.0
    $region29: #{tpu_custom_call.1} parent=1 // pred_fallthru
      _
    %v70 = vld [vmem:[#allocation2] sm:$0xff]
    %v71 = vld [vmem:[#allocation2 + $0x8] sm:$0xff]
    %v72 = vld [vmem:[#allocation5] sm:$0xff]
    %v73 = vld [vmem:[#allocation5 + $0x8] sm:$0xff]
    %v74 = vld [vmem:[#allocation7] sm:$0xff]
    %v75 = vld [vmem:[#allocation7 + $0x8] sm:$0xff]
    %vm76 = vcmp.gt.f32.partialorder %v74, 0.0
    %vm77 = vcmp.gt.f32.partialorder %v75, 0.0
    %v78 = vsel %vm76, 1, 0
    %v79 = vsel %vm77, 1, 0
    %v80 = vcvt.s32.f32 %v78
    %v81 = vcvt.s32.f32 %v79
    %v82 = vsub.f32 1.0, %v70
    %v83 = vsub.f32 1.0, %v71
    %v84 = vmul.f32 %v82, %v82
    %v85 = vmul.f32 %v83, %v83
    %v86 = vmul.f32 %v70, %v70
    %v87 = vmul.f32 %v71, %v71
    %v88 = vmul.f32 %v84, -0.25
    %v89 = vmul.f32 %v85, -0.25
    %v90 = vmul.f32 %v86, -0.75
    %v91 = vmul.f32 %v87, -0.75
    %v92 = vsel %vm76, %v88, %v90
    %v93 = vsel %vm77, %v89, %v91
    %v94 = vsel %vm76, %v70, %v82
    %v95 = vsel %vm77, %v71, %v83
    %v96 = vand.u32 2147483647, %v94
    %v97 = vand.u32 2147483647, %v95
    %v98 = vadd.f32 %v96, 1e-09
    %v99 = vadd.f32 %v97, 1e-09
    %v100 = vlog2.pop %v98
    %v101 = vmul.f32 %v100, 0.6931472
    %v102 = vlog2.pop %v99
    %v103 = vmul.f32 %v102, 0.6931472
    %v104 = vmul.f32 %v92, %v101
    %v105 = vmul.f32 %v93, %v103
    %v106 = vsub.f32 %v72, %v74
    %v107 = vsub.f32 %v73, %v75
    %v108 = vmul.f32 %v106, %v106
    %v109 = vmul.f32 %v107, %v107
    %p110 = scmp.lt.s32.totalorder 0, 1
    // Predicated region
    $region30: #{tpu_custom_call.1} parent=1 // pred_check
      %p111 = pneg %p110
    $region31: #{tpu_custom_call.1} parent=1 // pred_check_branch
      %113 = sbr.rel (%p111) target = $region33
    $region32: #{tpu_custom_call.1} parent=1 // pred_region
      %v114 = vmul.f32 %v108, %v80
      %v115 = vmul.f32 %v109, %v81
      %v116 = vld [vmem:[#allocation8] sm:$0xff]
      %v117 = vadd.f32 %v104, %v105
      %v118 = vadd.f32 %v116, %v117
      %119 = vst [vmem:[#allocation8] sm:$0xff] %v118
      %s120 = scalar_lea.vmem [#allocation8], 8
      %v121 = vld [vmem:[%s120] sm:$0xff]
      %v122 = vadd.f32 %v108, %v109
      %v123 = vadd.f32 %v121, %v122
      %124 = vst [vmem:[%s120] sm:$0xff] %v123
      %s125 = scalar_lea.vmem [#allocation8], 16
      %v126 = vld [vmem:[%s125] sm:$0xff]
      %v127 = vadd.f32 %v114, %v115
      %v128 = vadd.f32 %v126, %v127
      %129 = vst [vmem:[%s125] sm:$0xff] %v128
      %s130 = scalar_lea.vmem [#allocation8], 24
      %v131 = vld [vmem:[%s130] sm:$0xff]
      %v132 = vadd.f32 %v80, %v81
      %v133 = vadd.f32 %v131, %v132
      %134 = vst [vmem:[%s130] sm:$0xff] %v133
    $region33: #{tpu_custom_call.1} parent=1 // pred_fallthru
      _
    %p135 = scmp.ge.s32.totalorder 0, 1
    // Predicated region
    $region34: #{tpu_custom_call.1} parent=1 // pred_check
      %p136 = pneg %p135
    $region35: #{tpu_custom_call.1} parent=1 // pred_check_branch
      %138 = sbr.rel (%p136) target = $region37
    $region36: #{tpu_custom_call.1} parent=1 // pred_region
      %v139 = vlaneseq
      %v140 = vshrl.u32 %v139, 7
      %v141 = vadd.s32 %v140, 8
      %s142 = smul.u32 0, 16
      %v143 = vstv %s142
      %v144 = vadd.s32 %v143, %v140
      %v145 = vadd.s32 %v143, %v141
      %vm146 = vcmp.lt.s32.totalorder %v144, 16
      %vm147 = vcmp.lt.s32.totalorder %v145, 16
      %vm148 = vmand %vm76, %vm146
      %vm149 = vmand %vm77, %vm147
      %v150 = vsel %vm146, %v104, 0.0
      %v151 = vsel %vm147, %v105, 0.0
      %v152 = vsel %vm146, %v108, 0.0
      %v153 = vsel %vm147, %v109, 0.0
      %v154 = vsel %vm148, %v108, 0.0
      %v155 = vsel %vm149, %v109, 0.0
      %v156 = vsel %vm148, 1, 0
      %v157 = vsel %vm149, 1, 0
      %v158 = vcvt.s32.f32 %v156
      %v159 = vcvt.s32.f32 %v157
      %v160 = vld [vmem:[#allocation8] sm:$0xff]
      %v161 = vadd.f32 %v150, %v151
      %v162 = vadd.f32 %v160, %v161
      %163 = vst [vmem:[#allocation8] sm:$0xff] %v162
      %s164 = scalar_lea.vmem [#allocation8], 8
      %v165 = vld [vmem:[%s164] sm:$0xff]
      %v166 = vadd.f32 %v152, %v153
      %v167 = vadd.f32 %v165, %v166
      %168 = vst [vmem:[%s164] sm:$0xff] %v167
      %s169 = scalar_lea.vmem [#allocation8], 16
      %v170 = vld [vmem:[%s169] sm:$0xff]
      %v171 = vadd.f32 %v154, %v155
      %v172 = vadd.f32 %v170, %v171
      %173 = vst [vmem:[%s169] sm:$0xff] %v172
      %s174 = scalar_lea.vmem [#allocation8], 24
      %v175 = vld [vmem:[%s174] sm:$0xff]
      %v176 = vadd.f32 %v158, %v159
      %v177 = vadd.f32 %v175, %v176
      %178 = vst [vmem:[%s174] sm:$0xff] %v177
    $region37: #{tpu_custom_call.1} parent=1 // pred_fallthru
      _
    // Predicated region
    $region38: #{tpu_custom_call.1} parent=1 // pred_check
      _
    $region39: #{tpu_custom_call.1} parent=1 // pred_check_branch
      %180 = sbr.rel (0) target = $region41
    $region40: #{tpu_custom_call.1} parent=1 // pred_region
      %182 = vsyncadd [#allocation4], 0
      %s183 = sshll.u32 [#allocation8], 4
      %s184 = int_to_ptr.vmem [resolvable:$true] %s183
      %s185 = sshll.u32 %s3, 4
      %s186 = int_to_ptr.hbm [resolvable:$true] %s185
      %191 = dma.vmem_to_hbm [thread:$0]  %s184, 512, %s186, [#allocation4], 128, 128, 8
    $region41: #{tpu_custom_call.1} parent=1 // pred_fallthru
      _
    // Predicated region
    $region42: #{tpu_custom_call.1} parent=1 // pred_check
      _
    $region43: #{tpu_custom_call.1} parent=1 // pred_check_branch
      %193 = sbr.rel (0) target = $region45
    $region44: #{tpu_custom_call.1} parent=1 // pred_region
      %195 = dma.done [#allocation4], 512
    $region45: #{tpu_custom_call.1} parent=1 // pred_fallthru
      _
    %196 = vsyncpa [#allocation3], 1
    %197 = vsyncpa [#allocation6], 1
    %198 = vsyncpa [#allocation4], 1

</llo_original>
